<compile_context>
chip_gen: v7x
topology: tpu7x:2x2x1
jax: 0.10.0
libtpu: 0.0.40
codegen_flags: <defaults>
</compile_context>

<pallas_src>
import functools

import jax
import jax.numpy as jnp
from jax import lax
from jax.experimental import pallas as pl
from jax.experimental.pallas import tpu as pltpu


# ----------------------------------------------------------------------------
# Kernels
# ----------------------------------------------------------------------------
def siamese_slab_kernel(g_ref, w_ref, b_ref, out_ref, *, tb, n, f, d):
    # g_ref:   (tb, 2, n, f) -- tb pairs of graphs for this grid step
    # w_ref:   (f, d)        -- shared GNN weight (Siamese)
    # b_ref:   (1, d)
    # out_ref: (1, tb*n, tb*n) -- dense slab; diagonal (n,n) blocks are the
    #                             per-pair outputs (extracted in the wrapper)
    g = g_ref[...].reshape(2 * tb * n, f)

    # One fused MXU matmul for both graphs of all tb pairs (f32 accumulate),
    # tanh/bias epilogue in f32 (safe on v5e which has no bf16 VPU/EUP).
    e = jnp.tanh(
        jnp.dot(g, w_ref[...], preferred_element_type=jnp.float32) + b_ref[...]
    )                                            # (2*tb*n, d)
    e = e.reshape(tb, 2, n, d)
    e1 = e[:, 0].reshape(tb * n, d)              # pair-major rows
    e2 = e[:, 1].reshape(tb * n, d)

    # Single (tb*n, d) x (d, tb*n) MXU pass; contracting-last-dim form so no
    # per-pair transpose is emitted.  Result is naturally lane/sublane dense.
    s = lax.dot_general(
        e1, e2,
        dimension_numbers=(((1,), (1,)), ((), ())),
        preferred_element_type=jnp.float32,
    )                                            # (tb*n, tb*n)
    out_ref[0] = s


def siamese_pair_kernel(g_ref, w_ref, b_ref, out_ref, *, tb, n, f, d):
    # Fallback for large tb*n: per-pair batched contraction, output stored as
    # (tb, n, n) directly (lane-dense when n >= 128 -- the regime where this
    # path is used).
    g = g_ref[...].reshape(2 * tb * n, f)
    e = jnp.tanh(
        jnp.dot(g, w_ref[...], preferred_element_type=jnp.float32) + b_ref[...]
    )
    e = e.reshape(tb, 2, n, d)
    out_ref[...] = jnp.einsum(
        "bnd,bmd->bnm", e[:, 0], e[:, 1], preferred_element_type=jnp.float32
    )


# ----------------------------------------------------------------------------
# Hardware queries (defensive -- perf hints only, never correctness-critical)
# ----------------------------------------------------------------------------
def _num_tensorcores():
    """TensorCores sharing the grid via 'parallel' semantics (1 on v5e/v6e,
    2 on v7x).  Falls back to 1 (correct everywhere, just single-core)."""
    try:
        info = pltpu.get_tpu_info()
        for name in ("num_tensorcores", "tensorcores_per_chip", "num_cores",
                     "cores_per_chip"):
            v = getattr(info, name, None)
            if isinstance(v, int) and v >= 1:
                return max(1, min(int(v), 2))
    except Exception:
        pass
    try:
        kind = jax.devices()[0].device_kind.lower()
        if "v7" in kind:
            return 2
    except Exception:
        pass
    return 1


def _vmem_capacity_bytes():
    try:
        cap = int(pltpu.get_tpu_info().vmem_capacity_bytes)
        if cap > 0:
            return cap
    except Exception:
        pass
    return 64 << 20  # conservative: v7x per-TC VMEM


# ----------------------------------------------------------------------------
# Tiling / budget selection
# ----------------------------------------------------------------------------
def _choose_tiling(B, N, F, D, num_tc, vmem_cap):
    """Pick (tb, G, B_pad): ~256 matmul rows per step, grid steps a multiple
    of the TensorCore count, block footprint within a VMEM budget."""
    def footprint(tb):
        in_b = tb * 2 * N * F * 4
        e_b = 2 * tb * N * D * 4
        out_b = (tb * N) * (tb * N) * 4 if tb * N <= 256 else tb * N * N * 4
        return in_b + e_b + out_b

    tb = max(1, 256 // (2 * N))                      # fill the MXU row width
    budget = max(2 << 20, int(0.15 * vmem_cap))
    while tb > 1 and footprint(tb) > budget:
        tb -= 1

    G = max(num_tc, pl.cdiv(B, tb))
    if G % num_tc:
        G += num_tc - (G % num_tc)                   # shard across all TCs
    tb = pl.cdiv(B, G)
    B_pad = G * tb                                   # pad odd/prime B
    return tb, G, B_pad


def _vmem_limit_bytes(tb, N, F, D, use_slab, vmem_cap):
    dbl = 2  # double-buffered pipeline streams
    out_elems = (tb * N) * (tb * N) if use_slab else tb * N * N
    in_bytes = dbl * tb * 2 * N * F * 4
    out_bytes = dbl * out_elems * 4
    wgt_bytes = dbl * (F * D + D) * 4
    scratch = 4 * (2 * tb * N * D + out_elems) * 4   # intermediates headroom
    total = in_bytes + out_bytes + wgt_bytes + scratch
    cap = int(0.6 * vmem_cap)                        # generation-aware cap
    return int(min(max(2 * total, 4 << 20), cap))


# ----------------------------------------------------------------------------
# Wrapper
# ----------------------------------------------------------------------------
def siamese_forward(sample, w, b, *, tb=None):
    """sample: [B, 2, N, F] float32. Returns (out [B, N, N], mask [B, N])."""
    B, two, N, F = sample.shape
    assert two == 2
    D = w.shape[1]

    num_tc = _num_tensorcores()
    vmem_cap = _vmem_capacity_bytes()

    if tb is None:
        tb, G, B_pad = _choose_tiling(B, N, F, D, num_tc, vmem_cap)
    else:
        assert B % tb == 0, (B, tb)
        G, B_pad = B // tb, B

    if B_pad != B:
        pad = jnp.zeros((B_pad - B, 2, N, F), dtype=sample.dtype)
        sample_p = jnp.concatenate([sample, pad], axis=0)
    else:
        sample_p = sample

    use_slab = (tb * N) <= 256
    b2 = b.reshape(1, D)

    # Advisory cost so XLA schedules/overlaps around this tiny custom call.
    gnn_flops = 2 * (2 * B_pad * N) * F * D
    if use_slab:
        pair_flops = 2 * G * (tb * N) * (tb * N) * D
        out_bytes = G * (tb * N) * (tb * N) * 4
    else:
        pair_flops = 2 * B_pad * N * N * D
        out_bytes = B_pad * N * N * 4
    cost = pl.CostEstimate(
        flops=gnn_flops + pair_flops,
        transcendentals=2 * B_pad * N * D,
        bytes_accessed=B_pad * 2 * N * F * 4 + (F * D + D) * 4 + out_bytes,
    )

    in_specs = [
        # Both graphs of tb pairs in one DMA stream (blocked batch dim).
        pl.BlockSpec((tb, 2, N, F), lambda i: (i, 0, 0, 0)),
        pl.BlockSpec((F, D), lambda i: (0, 0)),        # W (shared / Siamese)
        pl.BlockSpec((1, D), lambda i: (0, 0)),        # bias
    ]
    compiler_params = pltpu.CompilerParams(
        dimension_semantics=("parallel",),
        vmem_limit_bytes=_vmem_limit_bytes(tb, N, F, D, use_slab, vmem_cap),
    )

    if use_slab:
        kernel = functools.partial(siamese_slab_kernel, tb=tb, n=N, f=F, d=D)
        slab = pl.pallas_call(
            kernel,
            out_shape=jax.ShapeDtypeStruct((G, tb * N, tb * N), jnp.float32),
            grid_spec=pltpu.PrefetchScalarGridSpec(
                num_scalar_prefetch=0,
                grid=(G,),
                in_specs=in_specs,
                out_specs=pl.BlockSpec((1, tb * N, tb * N),
                                       lambda i: (i, 0, 0)),
            ),
            compiler_params=compiler_params,
            cost_estimate=cost,
        )(sample_p, w, b2)

        # Extract the tb diagonal (N, N) blocks of each per-step slab (XLA-side).
        idx = jnp.arange(tb)
        slab5 = slab.reshape(G, tb, N, tb, N)
        diag = slab5[:, idx, :, idx, :]                # (tb, G, N, N)
        out = jnp.moveaxis(diag, 0, 1).reshape(B_pad, N, N)[:B]
    else:
        kernel = functools.partial(siamese_pair_kernel, tb=tb, n=N, f=F, d=D)
        out = pl.pallas_call(
            kernel,
            out_shape=jax.ShapeDtypeStruct((B_pad, N, N), jnp.float32),
            grid_spec=pltpu.PrefetchScalarGridSpec(
                num_scalar_prefetch=0,
                grid=(G,),
                in_specs=in_specs,
                out_specs=pl.BlockSpec((tb, N, N), lambda i: (i, 0, 0)),
            ),
            compiler_params=compiler_params,
            cost_estimate=cost,
        )(sample_p, w, b2)[:B]

    # torch.ones(g1.size()[:-1]) -- all-ones mask on the tensor path; it never
    # enters the kernel and is only returned to match the module API.
    mask = jnp.ones((B, N), dtype=sample.dtype)
    return out, mask


# ----------------------------------------------------------------------------
# Pure-JAX reference
# ----------------------------------------------------------------------------
def reference_forward(sample, w, b):
    g1, g2 = sample[:, 0], sample[:, 1]
    mask = jnp.ones(g1.shape[:-1], dtype=sample.dtype)
    emb1 = jnp.tanh(g1 @ w + b) * mask[..., None]
    emb2 = jnp.tanh(g2 @ w + b) * mask[..., None]
    out = jnp.einsum("bnd,bmd->bnm", emb1, emb2)
    return out, mask


if __name__ == "__main__":
    # Small shapes consistent with the module.  On 1-TC chips this runs as a
    # single grid step with a 256-row fused GNN matmul and a 128x128 slab;
    # on 2-TC chips it splits into 2 parallel steps of 128 rows / 64x64 slabs.
    B, N, F, D = 8, 16, 32, 32

    key = jax.random.PRNGKey(0)
    k_x, k_w, k_b = jax.random.split(key, 3)

    sample = jax.random.normal(k_x, (B, 2, N, F), dtype=jnp.float32)
    # Deterministic synthetic gnn parameters (no checkpoint loading).
    w = jax.random.normal(k_w, (F, D), dtype=jnp.float32) * 0.1
    b = jax.random.normal(k_b, (D,), dtype=jnp.float32) * 0.1

    out, mask = siamese_forward(sample, w, b)
    out = jax.block_until_ready(out)
    mask = jax.block_until_ready(mask)

    ref_out, ref_mask = reference_forward(sample, w, b)
    assert out.shape == (B, N, N)
    assert mask.shape == (B, N)
    assert jnp.allclose(out, ref_out, atol=1e-4, rtol=1e-4)
    assert jnp.allclose(mask, ref_mask)

    print("KERNEL_OK")
</pallas_src>

<mosaic_0001>
module attributes {stable_mosaic.version = 11 : i64} {
  func.func @siamese_slab_kernel(%arg0: i32, %arg1: memref<8x2x16x32xf32, #tpu.memory_space<vmem>>, %arg2: memref<32x32xf32, #tpu.memory_space<vmem>>, %arg3: memref<1x32xf32, #tpu.memory_space<vmem>>, %arg4: memref<1x128x128xf32, #tpu.memory_space<vmem>>) attributes {dimension_semantics = [#tpu.dimension_semantics<parallel>], iteration_bounds = array<i64: 1>, scalar_prefetch = 0 : i64, scratch_operands = 0 : i64, tpu.core_type = #tpu.core_type<tc>, window_params = [{transform_indices = @transform_0, window_bounds = array<i64: 8, 2, 16, 32>}, {pipeline_mode = #tpu.pipeline_mode<synchronous>, transform_indices = @transform_1, window_bounds = array<i64: 32, 32>}, {pipeline_mode = #tpu.pipeline_mode<synchronous>, transform_indices = @transform_2, window_bounds = array<i64: 1, 32>}, {transform_indices = @transform_3, window_bounds = array<i64: 1, 128, 128>}]} {
    %c0 = arith.constant 0 : index
    %c0_0 = arith.constant 0 : index
    %c0_1 = arith.constant 0 : index
    %c0_2 = arith.constant 0 : index
    %0 = vector.load %arg1[%c0, %c0_0, %c0_1, %c0_2] : memref<8x2x16x32xf32, #tpu.memory_space<vmem>>, vector<8x2x16x32xf32>
    %1 = vector.shape_cast %0 : vector<8x2x16x32xf32> to vector<256x32xf32>
    %c0_3 = arith.constant 0 : index
    %c0_4 = arith.constant 0 : index
    %2 = vector.load %arg2[%c0_3, %c0_4] : memref<32x32xf32, #tpu.memory_space<vmem>>, vector<32x32xf32>
    %cst = arith.constant dense<0.000000e+00> : vector<256x32xf32>
    %3 = tpu.matmul %1, %2, %cst {dimension_numbers = #tpu.dot_dimension_numbers<[1], [0], [0], [1], [0, 0, 1, 1], [], []>} : vector<256x32xf32>, vector<32x32xf32>, vector<256x32xf32> -> vector<256x32xf32>
    %c0_5 = arith.constant 0 : index
    %c0_6 = arith.constant 0 : index
    %4 = vector.load %arg3[%c0_5, %c0_6] : memref<1x32xf32, #tpu.memory_space<vmem>>, vector<1x32xf32>
    %5 = vector.broadcast %4 : vector<1x32xf32> to vector<256x32xf32>
    %6 = arith.addf %3, %5 : vector<256x32xf32>
    %7 = math.tanh %6 : vector<256x32xf32>
    %8 = vector.shape_cast %7 : vector<256x32xf32> to vector<8x2x16x32xf32>
    %9 = vector.extract_strided_slice %8 {offsets = [0, 0, 0, 0], sizes = [8, 1, 16, 32], strides = [1, 1, 1, 1]} : vector<8x2x16x32xf32> to vector<8x1x16x32xf32>
    %10 = vector.shape_cast %9 : vector<8x1x16x32xf32> to vector<8x16x32xf32>
    %11 = vector.shape_cast %10 : vector<8x16x32xf32> to vector<128x32xf32>
    %12 = vector.extract_strided_slice %8 {offsets = [0, 1, 0, 0], sizes = [8, 1, 16, 32], strides = [1, 1, 1, 1]} : vector<8x2x16x32xf32> to vector<8x1x16x32xf32>
    %13 = vector.shape_cast %12 : vector<8x1x16x32xf32> to vector<8x16x32xf32>
    %14 = vector.shape_cast %13 : vector<8x16x32xf32> to vector<128x32xf32>
    %cst_7 = arith.constant dense<0.000000e+00> : vector<128x128xf32>
    %15 = tpu.matmul %11, %14, %cst_7 {dimension_numbers = #tpu.dot_dimension_numbers<[1], [1], [0], [0], [0, 0, 1, 0], [], []>} : vector<128x32xf32>, vector<128x32xf32>, vector<128x128xf32> -> vector<128x128xf32>
    %c0_8 = arith.constant 0 : index
    %c0_9 = arith.constant 0 : index
    %c0_10 = arith.constant 0 : index
    %16 = vector.load %arg4[%c0_8, %c0_9, %c0_10] : memref<1x128x128xf32, #tpu.memory_space<vmem>>, vector<1x128x128xf32>
    %17 = vector.shape_cast %16 : vector<1x128x128xf32> to vector<128x128xf32>
    %18 = vector.shape_cast %15 : vector<128x128xf32> to vector<1x128x128xf32>
    tpu.vector_store %arg4[%c0_8, %c0_9, %c0_10], %18 {strides = array<i32>} : memref<1x128x128xf32, #tpu.memory_space<vmem>>, vector<1x128x128xf32>,
    return
  }
  func.func @transform_0(%arg0: i32) -> (i32, i32, i32, i32) {
    %c0_i32 = arith.constant 0 : i32
    %c0_i32_0 = arith.constant 0 : i32
    %c0_i32_1 = arith.constant 0 : i32
    %c0_i32_2 = arith.constant 0 : i32
    return %arg0, %c0_i32, %c0_i32_0, %c0_i32_1 : i32, i32, i32, i32
  }
  func.func @transform_1(%arg0: i32) -> (i32, i32) {
    %c0_i32 = arith.constant 0 : i32
    %c0_i32_0 = arith.constant 0 : i32
    %c0_i32_1 = arith.constant 0 : i32
    return %c0_i32, %c0_i32_0 : i32, i32
  }
  func.func @transform_2(%arg0: i32) -> (i32, i32) {
    %c0_i32 = arith.constant 0 : i32
    %c0_i32_0 = arith.constant 0 : i32
    %c0_i32_1 = arith.constant 0 : i32
    return %c0_i32, %c0_i32_0 : i32, i32
  }
  func.func @transform_3(%arg0: i32) -> (i32, i32, i32) {
    %c0_i32 = arith.constant 0 : i32
    %c0_i32_0 = arith.constant 0 : i32
    %c0_i32_1 = arith.constant 0 : i32
    return %arg0, %c0_i32, %c0_i32_0 : i32, i32, i32
  }
}

</mosaic_0001>

<llo_original>
// kernel: tpu_custom_call.1
$region0: #{tpu_custom_call.1}
  #allocation0 [shape = 'u32[]', space=smem, size = 0x4, offset = 0x4, fixed_abs, tag = 'smem constant byte address 0x4 - core index']
  #allocation1 [shape = 'u32[144,128]{1,0:T(1,128)}', space=vmem, size = 0x12000, scoped, tag = 'internal scratch']
  %s0 = inlined_call_operand.hbm [shape: f32[8,2,16,32], index: 0, kind: input, shape index: {}]
  %s1 = inlined_call_operand.hbm [shape: f32[32,32], index: 1, kind: input, shape index: {}]
  %s2 = inlined_call_operand.vmem [shape: f32[1,32], index: 2, kind: input, shape index: {}]
  %s3 = inlined_call_operand.hbm [shape: f32[1,128,128], index: 3, kind: output, shape index: {}]
  %s4 = sld [smem:[#allocation0]]
  $region30: #{tpu_custom_call.1} parent=0
    _
  %s6 = ssub.s32 1, %s4
  %s7 = scalar_select 0, %s6, %s4
  $region1: #{tpu_custom_call.1} parent=0
    #allocation2 [shape = 'u8[131072]{0}', space=vmem, size = 0x20000, scoped, tag = 'input window, operand 0, single buffered']
    #allocation3 [shape = 's32[1]{0}', space=sflag, size = 0x4, scoped, tag = 'scoped memory for tpu_custom_call.1']
    #allocation4 [shape = 's32[1]{0}', space=sflag, size = 0x4, scoped, tag = 'scoped memory for tpu_custom_call.1']
    #allocation5 [shape = 'u8[16384]{0}', space=vmem, size = 0x4000, scoped, tag = 'input window, operand 1, single buffered']
    #allocation6 [shape = 's32[1]{0}', space=sflag, size = 0x4, scoped, tag = 'scoped memory for tpu_custom_call.1']
    #allocation7 [shape = 'u8[65536]{0}', space=vmem, size = 0x10000, scoped, tag = 'output window, operand 0, single buffered']
    %8 = vsyncpa [#allocation3], 0
    %9 = vsyncpa [#allocation6], 0
    %10 = vsyncpa [#allocation4], 0
    // Predicated region
    $region2: #{tpu_custom_call.1} parent=1 // pred_check
      _
    $region3: #{tpu_custom_call.1} parent=1 // pred_check_branch
      %12 = sbr.rel (0) target = $region5
    $region4: #{tpu_custom_call.1} parent=1 // pred_region
      %s14 = ssub.s32 4096, 4096
      %15 = vsyncadd [#allocation3], %s14
      %s16 = sshll.u32 [#allocation2], 4
      %s17 = int_to_ptr.vmem [resolvable:$true] %s16
      %22 = dma.hbm_to_vmem [thread:$0]  %s0, 4096, %s17, [#allocation3], 128, 128, 8
    $region5: #{tpu_custom_call.1} parent=1 // pred_fallthru
      _
    // Predicated region
    $region6: #{tpu_custom_call.1} parent=1 // pred_check
      _
    $region7: #{tpu_custom_call.1} parent=1 // pred_check_branch
      %24 = sbr.rel (0) target = $region9
    $region8: #{tpu_custom_call.1} parent=1 // pred_region
      %s26 = ssub.s32 512, 512
      %27 = vsyncadd [#allocation6], %s26
      %s28 = sshll.u32 [#allocation5], 4
      %s29 = int_to_ptr.vmem [resolvable:$true] %s28
      %34 = dma.hbm_to_vmem [thread:$0]  %s1, 512, %s29, [#allocation6], 128, 128, 8
    $region9: #{tpu_custom_call.1} parent=1 // pred_fallthru
      _
    // Predicated region
    $region10: #{tpu_custom_call.1} parent=1 // pred_check
      _
    $region11: #{tpu_custom_call.1} parent=1 // pred_check_branch
      %36 = sbr.rel (0) target = $region13
    $region12: #{tpu_custom_call.1} parent=1 // pred_region
      _
    $region13: #{tpu_custom_call.1} parent=1 // pred_fallthru
      _
    // Predicated region
    $region14: #{tpu_custom_call.1} parent=1 // pred_check
      _
    $region15: #{tpu_custom_call.1} parent=1 // pred_check_branch
      %38 = sbr.rel (0) target = $region17
    $region16: #{tpu_custom_call.1} parent=1 // pred_region
      %39 = dma.done [#allocation3], 4096
    $region17: #{tpu_custom_call.1} parent=1 // pred_fallthru
      _
    // Predicated region
    $region18: #{tpu_custom_call.1} parent=1 // pred_check
      _
    $region19: #{tpu_custom_call.1} parent=1 // pred_check_branch
      %41 = sbr.rel (0) target = $region21
    $region20: #{tpu_custom_call.1} parent=1 // pred_region
      %42 = dma.done [#allocation6], 512
    $region21: #{tpu_custom_call.1} parent=1 // pred_fallthru
      _
    %v43 = vld [vmem:[#allocation2] sm:$0xff]
    %v44 = vld [vmem:[#allocation2 + $0x8] sm:$0xff]
    %v45 = vld [vmem:[#allocation2 + $0x10] sm:$0xff]
    %v46 = vld [vmem:[#allocation2 + $0x18] sm:$0xff]
    %v47 = vld [vmem:[#allocation2 + $0x20] sm:$0xff]
    %v48 = vld [vmem:[#allocation2 + $0x28] sm:$0xff]
    %v49 = vld [vmem:[#allocation2 + $0x30] sm:$0xff]
    %v50 = vld [vmem:[#allocation2 + $0x38] sm:$0xff]
    %v51 = vld [vmem:[#allocation2 + $0x40] sm:$0xff]
    %v52 = vld [vmem:[#allocation2 + $0x48] sm:$0xff]
    %v53 = vld [vmem:[#allocation2 + $0x50] sm:$0xff]
    %v54 = vld [vmem:[#allocation2 + $0x58] sm:$0xff]
    %v55 = vld [vmem:[#allocation2 + $0x60] sm:$0xff]
    %v56 = vld [vmem:[#allocation2 + $0x68] sm:$0xff]
    %v57 = vld [vmem:[#allocation2 + $0x70] sm:$0xff]
    %v58 = vld [vmem:[#allocation2 + $0x78] sm:$0xff]
    %v59 = vld [vmem:[#allocation2 + $0x80] sm:$0xff]
    %v60 = vld [vmem:[#allocation2 + $0x88] sm:$0xff]
    %v61 = vld [vmem:[#allocation2 + $0x90] sm:$0xff]
    %v62 = vld [vmem:[#allocation2 + $0x98] sm:$0xff]
    %v63 = vld [vmem:[#allocation2 + $0xa0] sm:$0xff]
    %v64 = vld [vmem:[#allocation2 + $0xa8] sm:$0xff]
    %v65 = vld [vmem:[#allocation2 + $0xb0] sm:$0xff]
    %v66 = vld [vmem:[#allocation2 + $0xb8] sm:$0xff]
    %v67 = vld [vmem:[#allocation2 + $0xc0] sm:$0xff]
    %v68 = vld [vmem:[#allocation2 + $0xc8] sm:$0xff]
    %v69 = vld [vmem:[#allocation2 + $0xd0] sm:$0xff]
    %v70 = vld [vmem:[#allocation2 + $0xd8] sm:$0xff]
    %v71 = vld [vmem:[#allocation2 + $0xe0] sm:$0xff]
    %v72 = vld [vmem:[#allocation2 + $0xe8] sm:$0xff]
    %v73 = vld [vmem:[#allocation2 + $0xf0] sm:$0xff]
    %v74 = vld [vmem:[#allocation2 + $0xf8] sm:$0xff]
    %v75 = vld [vmem:[#allocation5] sm:$0xff]
    %v76 = vld [vmem:[#allocation5 + $0x8] sm:$0xff]
    %v77 = vld [vmem:[#allocation5 + $0x10] sm:$0xff]
    %v78 = vld [vmem:[#allocation5 + $0x18] sm:$0xff]
    %v79 = vld [vmem:[%s2] sm:$0x1]
    %v81 = vlaneseq
    %v82 = vshrl.u32 %v81, 7
    %v83 = vsub.s32 0, %v82
    %v84 = vrot.slane %v79, %v83
    %vm86 = vcmask 261120
    %v88 = vsel %vm86, %v43, 0
    %v91 = vsel %vm86, %v44, 0
    %v94 = vsel %vm86, %v45, 0
    %v97 = vsel %vm86, %v46, 0
    %v100 = vsel %vm86, %v47, 0
    %v103 = vsel %vm86, %v48, 0
    %v106 = vsel %vm86, %v49, 0
    %v109 = vsel %vm86, %v50, 0
    %v112 = vsel %vm86, %v51, 0
    %v115 = vsel %vm86, %v52, 0
    %v118 = vsel %vm86, %v53, 0
    %v121 = vsel %vm86, %v54, 0
    %v124 = vsel %vm86, %v55, 0
    %v127 = vsel %vm86, %v56, 0
    %v130 = vsel %vm86, %v57, 0
    %v133 = vsel %vm86, %v58, 0
    %v136 = vsel %vm86, %v59, 0
    %v139 = vsel %vm86, %v60, 0
    %v142 = vsel %vm86, %v61, 0
    %v145 = vsel %vm86, %v62, 0
    %v148 = vsel %vm86, %v63, 0
    %v151 = vsel %vm86, %v64, 0
    %v154 = vsel %vm86, %v65, 0
    %v157 = vsel %vm86, %v66, 0
    %v160 = vsel %vm86, %v67, 0
    %v163 = vsel %vm86, %v68, 0
    %v166 = vsel %vm86, %v69, 0
    %v169 = vsel %vm86, %v70, 0
    %v172 = vsel %vm86, %v71, 0
    %v175 = vsel %vm86, %v72, 0
    %v178 = vsel %vm86, %v73, 0
    %v181 = vsel %vm86, %v74, 0
    %183 = vmatprep.subr.mxu0 0.0
    %184 = vmatpush1.msra.mxu0 %v75
    %185 = vmatprep.subr.mxu0 0.0
    %186 = vmatpush1.msra.mxu0 %v76
    %187 = vmatprep.subr.mxu0 0.0
    %188 = vmatpush1.msra.mxu0 %v77
    %189 = vmatprep.subr.mxu0 0.0
    %190 = vmatpush1.msra.mxu0 %v78
    %191 = vmatprep.subr.mxu0 0.0
    %192 = vmatpush1.msra.mxu0 0.0
    %193 = vmatprep.subr.mxu0 0.0
    %194 = vmatpush1.msra.mxu0 0.0
    %195 = vmatprep.subr.mxu0 0.0
    %196 = vmatpush1.msra.mxu0 0.0
    %197 = vmatprep.subr.mxu0 0.0
    %198 = vmatpush1.msra.mxu0 0.0
    %199 = vmatprep.subr.mxu0 0.0
    %200 = vmatpush1.msra.mxu0 0.0
    %201 = vmatprep.subr.mxu0 0.0
    %202 = vmatpush1.msra.mxu0 0.0
    %203 = vmatprep.subr.mxu0 0.0
    %204 = vmatpush1.msra.mxu0 0.0
    %205 = vmatprep.subr.mxu0 0.0
    %206 = vmatpush1.msra.mxu0 0.0
    %207 = vmatprep.subr.mxu0 0.0
    %208 = vmatpush1.msra.mxu0 0.0
    %209 = vmatprep.subr.mxu0 0.0
    %210 = vmatpush1.msra.mxu0 0.0
    %211 = vmatprep.subr.mxu0 0.0
    %212 = vmatpush1.msra.mxu0 0.0
    %213 = vmatprep.subr.mxu0 0.0
    %214 = vmatpush1.msra.mxu0 0.0
    %215 = vmatprep.subr.mxu0 0.0
    %216 = vmatpush1.msra.mxu0 0.0
    %217 = vmatprep.subr.mxu0 0.0
    %218 = vmatpush1.msra.mxu0 0.0
    %219 = vmatprep.subr.mxu0 0.0
    %220 = vmatpush1.msra.mxu0 0.0
    %221 = vmatprep.subr.mxu0 0.0
    %222 = vmatpush1.msra.mxu0 0.0
    %223 = vmatprep.subr.mxu0 0.0
    %224 = vmatpush1.msra.mxu0 0.0
    %225 = vmatprep.subr.mxu0 0.0
    %226 = vmatpush1.msra.mxu0 0.0
    %227 = vmatprep.subr.mxu0 0.0
    %228 = vmatpush1.msra.mxu0 0.0
    %229 = vmatprep.subr.mxu0 0.0
    %230 = vmatpush1.msra.mxu0 0.0
    %231 = vmatprep.subr.mxu0 0.0
    %232 = vmatpush1.msra.mxu0 0.0
    %233 = vmatprep.subr.mxu0 0.0
    %234 = vmatpush1.msra.mxu0 0.0
    %235 = vmatprep.subr.mxu0 0.0
    %236 = vmatpush1.msra.mxu0 0.0
    %237 = vmatprep.subr.mxu0 0.0
    %238 = vmatpush1.msra.mxu0 0.0
    %239 = vmatprep.subr.mxu0 0.0
    %240 = vmatpush1.msra.mxu0 0.0
    %241 = vmatprep.subr.mxu0 0.0
    %242 = vmatpush1.msra.mxu0 0.0
    %243 = vmatprep.subr.mxu0 0.0
    %244 = vmatpush1.msra.mxu0 0.0
    %245 = vmatprep.subr.mxu0 0.0
    %246 = vmatpush1.msra.mxu0 0.0
    %247 = vmatprep.mubr.f32.mxu0 0.0
    %248 = vmatmul.mubr.f32.gmra.mrb[0].mxu0 %v88
    %v249 = vpop.f32.mrb[0].mxu0
    %v250 = vadd.f32 %v84, %v249
    %v251 = vpop.f32.mrb[0].mxu0
    %252 = vmatprep.mubr.f32.mxu0 0.0
    %253 = vmatmul.mubr.f32.gmra.mrb[0].mxu0 %v91
    %v254 = vpop.f32.mrb[0].mxu0
    %v255 = vadd.f32 %v84, %v254
    %v256 = vpop.f32.mrb[0].mxu0
    %257 = vmatprep.mubr.f32.mxu0 0.0
    %258 = vmatmul.mubr.f32.gmra.mrb[0].mxu0 %v94
    %v259 = vpop.f32.mrb[0].mxu0
    %v260 = vadd.f32 %v84, %v259
    %v261 = vpop.f32.mrb[0].mxu0
    %262 = vmatprep.mubr.f32.mxu0 0.0
    %263 = vmatmul.mubr.f32.gmra.mrb[0].mxu0 %v97
    %v264 = vpop.f32.mrb[0].mxu0
    %v265 = vadd.f32 %v84, %v264
    %v266 = vpop.f32.mrb[0].mxu0
    %267 = vmatprep.mubr.f32.mxu0 0.0
    %268 = vmatmul.mubr.f32.gmra.mrb[0].mxu0 %v100
    %v269 = vpop.f32.mrb[0].mxu0
    %v270 = vadd.f32 %v84, %v269
    %v271 = vpop.f32.mrb[0].mxu0
    %272 = vmatprep.mubr.f32.mxu0 0.0
    %273 = vmatmul.mubr.f32.gmra.mrb[0].mxu0 %v103
    %v274 = vpop.f32.mrb[0].mxu0
    %v275 = vadd.f32 %v84, %v274
    %v276 = vpop.f32.mrb[0].mxu0
    %277 = vmatprep.mubr.f32.mxu0 0.0
    %278 = vmatmul.mubr.f32.gmra.mrb[0].mxu0 %v106
    %v279 = vpop.f32.mrb[0].mxu0
    %v280 = vadd.f32 %v84, %v279
    %v281 = vpop.f32.mrb[0].mxu0
    %282 = vmatprep.mubr.f32.mxu0 0.0
    %283 = vmatmul.mubr.f32.gmra.mrb[0].mxu0 %v109
    %v284 = vpop.f32.mrb[0].mxu0
    %v285 = vadd.f32 %v84, %v284
    %v286 = vpop.f32.mrb[0].mxu0
    %287 = vmatprep.mubr.f32.mxu0 0.0
    %288 = vmatmul.mubr.f32.gmra.mrb[0].mxu0 %v112
    %v289 = vpop.f32.mrb[0].mxu0
    %v290 = vadd.f32 %v84, %v289
    %v291 = vpop.f32.mrb[0].mxu0
    %292 = vmatprep.mubr.f32.mxu0 0.0
    %293 = vmatmul.mubr.f32.gmra.mrb[0].mxu0 %v115
    %v294 = vpop.f32.mrb[0].mxu0
    %v295 = vadd.f32 %v84, %v294
    %v296 = vpop.f32.mrb[0].mxu0
    %297 = vmatprep.mubr.f32.mxu0 0.0
    %298 = vmatmul.mubr.f32.gmra.mrb[0].mxu0 %v118
    %v299 = vpop.f32.mrb[0].mxu0
    %v300 = vadd.f32 %v84, %v299
    %v301 = vpop.f32.mrb[0].mxu0
    %302 = vmatprep.mubr.f32.mxu0 0.0
    %303 = vmatmul.mubr.f32.gmra.mrb[0].mxu0 %v121
    %v304 = vpop.f32.mrb[0].mxu0
    %v305 = vadd.f32 %v84, %v304
    %v306 = vpop.f32.mrb[0].mxu0
    %307 = vmatprep.mubr.f32.mxu0 0.0
    %308 = vmatmul.mubr.f32.gmra.mrb[0].mxu0 %v124
    %v309 = vpop.f32.mrb[0].mxu0
    %v310 = vadd.f32 %v84, %v309
    %v311 = vpop.f32.mrb[0].mxu0
    %312 = vmatprep.mubr.f32.mxu0 0.0
    %313 = vmatmul.mubr.f32.gmra.mrb[0].mxu0 %v127
    %v314 = vpop.f32.mrb[0].mxu0
    %v315 = vadd.f32 %v84, %v314
    %v316 = vpop.f32.mrb[0].mxu0
    %317 = vmatprep.mubr.f32.mxu0 0.0
    %318 = vmatmul.mubr.f32.gmra.mrb[0].mxu0 %v130
    %v319 = vpop.f32.mrb[0].mxu0
    %v320 = vadd.f32 %v84, %v319
    %v321 = vpop.f32.mrb[0].mxu0
    %322 = vmatprep.mubr.f32.mxu0 0.0
    %323 = vmatmul.mubr.f32.gmra.mrb[0].mxu0 %v133
    %v324 = vpop.f32.mrb[0].mxu0
    %v325 = vadd.f32 %v84, %v324
    %v326 = vpop.f32.mrb[0].mxu0
    %327 = vmatprep.mubr.f32.mxu0 0.0
    %328 = vmatmul.mubr.f32.gmra.mrb[0].mxu0 %v136
    %v329 = vpop.f32.mrb[0].mxu0
    %v330 = vadd.f32 %v84, %v329
    %v331 = vpop.f32.mrb[0].mxu0
    %332 = vmatprep.mubr.f32.mxu0 0.0
    %333 = vmatmul.mubr.f32.gmra.mrb[0].mxu0 %v139
    %v334 = vpop.f32.mrb[0].mxu0
    %v335 = vadd.f32 %v84, %v334
    %v336 = vpop.f32.mrb[0].mxu0
    %337 = vmatprep.mubr.f32.mxu0 0.0
    %338 = vmatmul.mubr.f32.gmra.mrb[0].mxu0 %v142
    %v339 = vpop.f32.mrb[0].mxu0
    %v340 = vadd.f32 %v84, %v339
    %v341 = vpop.f32.mrb[0].mxu0
    %342 = vmatprep.mubr.f32.mxu0 0.0
    %343 = vmatmul.mubr.f32.gmra.mrb[0].mxu0 %v145
    %v344 = vpop.f32.mrb[0].mxu0
    %v345 = vadd.f32 %v84, %v344
    %v346 = vpop.f32.mrb[0].mxu0
    %347 = vmatprep.mubr.f32.mxu0 0.0
    %348 = vmatmul.mubr.f32.gmra.mrb[0].mxu0 %v148
    %v349 = vpop.f32.mrb[0].mxu0
    %v350 = vadd.f32 %v84, %v349
    %v351 = vpop.f32.mrb[0].mxu0
    %352 = vmatprep.mubr.f32.mxu0 0.0
    %353 = vmatmul.mubr.f32.gmra.mrb[0].mxu0 %v151
    %v354 = vpop.f32.mrb[0].mxu0
    %v355 = vadd.f32 %v84, %v354
    %v356 = vpop.f32.mrb[0].mxu0
    %357 = vmatprep.mubr.f32.mxu0 0.0
    %358 = vmatmul.mubr.f32.gmra.mrb[0].mxu0 %v154
    %v359 = vpop.f32.mrb[0].mxu0
    %v360 = vadd.f32 %v84, %v359
    %v361 = vpop.f32.mrb[0].mxu0
    %362 = vmatprep.mubr.f32.mxu0 0.0
    %363 = vmatmul.mubr.f32.gmra.mrb[0].mxu0 %v157
    %v364 = vpop.f32.mrb[0].mxu0
    %v365 = vadd.f32 %v84, %v364
    %v366 = vpop.f32.mrb[0].mxu0
    %367 = vmatprep.mubr.f32.mxu0 0.0
    %368 = vmatmul.mubr.f32.gmra.mrb[0].mxu0 %v160
    %v369 = vpop.f32.mrb[0].mxu0
    %v370 = vadd.f32 %v84, %v369
    %v371 = vpop.f32.mrb[0].mxu0
    %372 = vmatprep.mubr.f32.mxu0 0.0
    %373 = vmatmul.mubr.f32.gmra.mrb[0].mxu0 %v163
    %v374 = vpop.f32.mrb[0].mxu0
    %v375 = vadd.f32 %v84, %v374
    %v376 = vpop.f32.mrb[0].mxu0
    %377 = vmatprep.mubr.f32.mxu0 0.0
    %378 = vmatmul.mubr.f32.gmra.mrb[0].mxu0 %v166
    %v379 = vpop.f32.mrb[0].mxu0
    %v380 = vadd.f32 %v84, %v379
    %v381 = vpop.f32.mrb[0].mxu0
    %382 = vmatprep.mubr.f32.mxu0 0.0
    %383 = vmatmul.mubr.f32.gmra.mrb[0].mxu0 %v169
    %v384 = vpop.f32.mrb[0].mxu0
    %v385 = vadd.f32 %v84, %v384
    %v386 = vpop.f32.mrb[0].mxu0
    %387 = vmatprep.mubr.f32.mxu0 0.0
    %388 = vmatmul.mubr.f32.gmra.mrb[0].mxu0 %v172
    %v389 = vpop.f32.mrb[0].mxu0
    %v390 = vadd.f32 %v84, %v389
    %v391 = vpop.f32.mrb[0].mxu0
    %392 = vmatprep.mubr.f32.mxu0 0.0
    %393 = vmatmul.mubr.f32.gmra.mrb[0].mxu0 %v175
    %v394 = vpop.f32.mrb[0].mxu0
    %v395 = vadd.f32 %v84, %v394
    %v396 = vpop.f32.mrb[0].mxu0
    %397 = vmatprep.mubr.f32.mxu0 0.0
    %398 = vmatmul.mubr.f32.gmra.mrb[0].mxu0 %v178
    %v399 = vpop.f32.mrb[0].mxu0
    %v400 = vadd.f32 %v84, %v399
    %v401 = vpop.f32.mrb[0].mxu0
    %402 = vmatprep.mubr.f32.mxu0 0.0
    %403 = vmatmul.mubr.f32.gmra.mrb[0].mxu0 %v181
    %v404 = vpop.f32.mrb[0].mxu0
    %v405 = vadd.f32 %v84, %v404
    %v406 = vpop.f32.mrb[0].mxu0
    %407 = vdwg.mxu0
    %v408 = vtanh.pop %v250
    %v409 = vtanh.pop %v255
    %v410 = vtanh.pop %v260
    %v411 = vtanh.pop %v265
    %v412 = vtanh.pop %v270
    %v413 = vtanh.pop %v275
    %v414 = vtanh.pop %v280
    %v415 = vtanh.pop %v285
    %v416 = vtanh.pop %v290
    %v417 = vtanh.pop %v295
    %v418 = vtanh.pop %v300
    %v419 = vtanh.pop %v305
    %v420 = vtanh.pop %v310
    %v421 = vtanh.pop %v315
    %v422 = vtanh.pop %v320
    %v423 = vtanh.pop %v325
    %v424 = vtanh.pop %v330
    %v425 = vtanh.pop %v335
    %v426 = vtanh.pop %v340
    %v427 = vtanh.pop %v345
    %v428 = vtanh.pop %v350
    %v429 = vtanh.pop %v355
    %v430 = vtanh.pop %v360
    %v431 = vtanh.pop %v365
    %v432 = vtanh.pop %v370
    %v433 = vtanh.pop %v375
    %v434 = vtanh.pop %v380
    %v435 = vtanh.pop %v385
    %v436 = vtanh.pop %v390
    %v437 = vtanh.pop %v395
    %v438 = vtanh.pop %v400
    %v439 = vtanh.pop %v405
    %v441 = vsel %vm86, %v408, 0
    %v444 = vsel %vm86, %v409, 0
    %v447 = vsel %vm86, %v412, 0
    %v450 = vsel %vm86, %v413, 0
    %v453 = vsel %vm86, %v416, 0
    %v456 = vsel %vm86, %v417, 0
    %v459 = vsel %vm86, %v420, 0
    %v462 = vsel %vm86, %v421, 0
    %v465 = vsel %vm86, %v424, 0
    %v468 = vsel %vm86, %v425, 0
    %v471 = vsel %vm86, %v428, 0
    %v474 = vsel %vm86, %v429, 0
    %v477 = vsel %vm86, %v432, 0
    %v480 = vsel %vm86, %v433, 0
    %v483 = vsel %vm86, %v436, 0
    %v486 = vsel %vm86, %v437, 0
    %v489 = vsel %vm86, %v410, 0
    %v492 = vsel %vm86, %v411, 0
    %v495 = vsel %vm86, %v414, 0
    %v498 = vsel %vm86, %v415, 0
    %v501 = vsel %vm86, %v418, 0
    %v504 = vsel %vm86, %v419, 0
    %v507 = vsel %vm86, %v422, 0
    %v510 = vsel %vm86, %v423, 0
    %v513 = vsel %vm86, %v426, 0
    %v516 = vsel %vm86, %v427, 0
    %v519 = vsel %vm86, %v430, 0
    %v522 = vsel %vm86, %v431, 0
    %v525 = vsel %vm86, %v434, 0
    %v528 = vsel %vm86, %v435, 0
    %v531 = vsel %vm86, %v438, 0
    %v534 = vsel %vm86, %v439, 0
    %536 = vmatprep.subr.mxu0 0.0
    %537 = vmatpush1.xpose.msra.mxu0 %v489
    %538 = vmatprep.subr.mxu0 0.0
    %539 = vmatpush1.xpose.msra.mxu0 %v492
    %540 = vmatprep.subr.mxu0 0.0
    %541 = vmatpush1.xpose.msra.mxu0 %v495
    %542 = vmatprep.subr.mxu0 0.0
    %543 = vmatpush1.xpose.msra.mxu0 %v498
    %544 = vmatprep.subr.mxu0 0.0
    %545 = vmatpush1.xpose.msra.mxu0 %v501
    %546 = vmatprep.subr.mxu0 0.0
    %547 = vmatpush1.xpose.msra.mxu0 %v504
    %548 = vmatprep.subr.mxu0 0.0
    %549 = vmatpush1.xpose.msra.mxu0 %v507
    %550 = vmatprep.subr.mxu0 0.0
    %551 = vmatpush1.xpose.msra.mxu0 %v510
    %552 = vmatprep.subr.mxu0 0.0
    %553 = vmatpush1.xpose.msra.mxu0 %v513
    %554 = vmatprep.subr.mxu0 0.0
    %555 = vmatpush1.xpose.msra.mxu0 %v516
    %556 = vmatprep.subr.mxu0 0.0
    %557 = vmatpush1.xpose.msra.mxu0 %v519
    %558 = vmatprep.subr.mxu0 0.0
    %559 = vmatpush1.xpose.msra.mxu0 %v522
    %560 = vmatprep.subr.mxu0 0.0
    %561 = vmatpush1.xpose.msra.mxu0 %v525
    %562 = vmatprep.subr.mxu0 0.0
    %563 = vmatpush1.xpose.msra.mxu0 %v528
    %564 = vmatprep.subr.mxu0 0.0
    %565 = vmatpush1.xpose.msra.mxu0 %v531
    %566 = vmatprep.subr.mxu0 0.0
    %567 = vmatpush1.xpose.msra.mxu0 %v534
    %568 = vmatprep.subr.mxu0 0.0
    %569 = vmatpush1.xpose.msra.mxu0 0.0
    %570 = vmatprep.subr.mxu0 0.0
    %571 = vmatpush1.xpose.msra.mxu0 0.0
    %572 = vmatprep.subr.mxu0 0.0
    %573 = vmatpush1.xpose.msra.mxu0 0.0
    %574 = vmatprep.subr.mxu0 0.0
    %575 = vmatpush1.xpose.msra.mxu0 0.0
    %576 = vmatprep.subr.mxu0 0.0
    %577 = vmatpush1.xpose.msra.mxu0 0.0
    %578 = vmatprep.subr.mxu0 0.0
    %579 = vmatpush1.xpose.msra.mxu0 0.0
    %580 = vmatprep.subr.mxu0 0.0
    %581 = vmatpush1.xpose.msra.mxu0 0.0
    %582 = vmatprep.subr.mxu0 0.0
    %583 = vmatpush1.xpose.msra.mxu0 0.0
    %584 = vmatprep.subr.mxu0 0.0
    %585 = vmatpush1.xpose.msra.mxu0 0.0
    %586 = vmatprep.subr.mxu0 0.0
    %587 = vmatpush1.xpose.msra.mxu0 0.0
    %588 = vmatprep.subr.mxu0 0.0
    %589 = vmatpush1.xpose.msra.mxu0 0.0
    %590 = vmatprep.subr.mxu0 0.0
    %591 = vmatpush1.xpose.msra.mxu0 0.0
    %592 = vmatprep.subr.mxu0 0.0
    %593 = vmatpush1.xpose.msra.mxu0 0.0
    %594 = vmatprep.subr.mxu0 0.0
    %595 = vmatpush1.xpose.msra.mxu0 0.0
    %596 = vmatprep.subr.mxu0 0.0
    %597 = vmatpush1.xpose.msra.mxu0 0.0
    %598 = vmatprep.subr.mxu0 0.0
    %599 = vmatpush1.xpose.msra.mxu0 0.0
    %600 = vmatprep.mubr.f32.mxu0 0.0
    %601 = vmatmul.mubr.f32.gmra.mrb[0].mxu0 %v441
    %v602 = vpop.f32.mrb[0].mxu0
    %v603 = vadd.f32 0.0, %v602
    %v604 = vpop.f32.mrb[0].mxu0
    %605 = vmatprep.mubr.f32.mxu0 0.0
    %606 = vmatmul.mubr.f32.gmra.mrb[0].mxu0 %v444
    %v607 = vpop.f32.mrb[0].mxu0
    %v608 = vadd.f32 0.0, %v607
    %v609 = vpop.f32.mrb[0].mxu0
    %610 = vmatprep.mubr.f32.mxu0 0.0
    %611 = vmatmul.mubr.f32.gmra.mrb[0].mxu0 %v447
    %v612 = vpop.f32.mrb[0].mxu0
    %v613 = vadd.f32 0.0, %v612
    %v614 = vpop.f32.mrb[0].mxu0
    %615 = vmatprep.mubr.f32.mxu0 0.0
    %616 = vmatmul.mubr.f32.gmra.mrb[0].mxu0 %v450
    %v617 = vpop.f32.mrb[0].mxu0
    %v618 = vadd.f32 0.0, %v617
    %v619 = vpop.f32.mrb[0].mxu0
    %620 = vmatprep.mubr.f32.mxu0 0.0
    %621 = vmatmul.mubr.f32.gmra.mrb[0].mxu0 %v453
    %v622 = vpop.f32.mrb[0].mxu0
    %v623 = vadd.f32 0.0, %v622
    %v624 = vpop.f32.mrb[0].mxu0
    %625 = vmatprep.mubr.f32.mxu0 0.0
    %626 = vmatmul.mubr.f32.gmra.mrb[0].mxu0 %v456
    %v627 = vpop.f32.mrb[0].mxu0
    %v628 = vadd.f32 0.0, %v627
    %v629 = vpop.f32.mrb[0].mxu0
    %630 = vmatprep.mubr.f32.mxu0 0.0
    %631 = vmatmul.mubr.f32.gmra.mrb[0].mxu0 %v459
    %v632 = vpop.f32.mrb[0].mxu0
    %v633 = vadd.f32 0.0, %v632
    %v634 = vpop.f32.mrb[0].mxu0
    %635 = vmatprep.mubr.f32.mxu0 0.0
    %636 = vmatmul.mubr.f32.gmra.mrb[0].mxu0 %v462
    %v637 = vpop.f32.mrb[0].mxu0
    %v638 = vadd.f32 0.0, %v637
    %v639 = vpop.f32.mrb[0].mxu0
    %640 = vmatprep.mubr.f32.mxu0 0.0
    %641 = vmatmul.mubr.f32.gmra.mrb[0].mxu0 %v465
    %v642 = vpop.f32.mrb[0].mxu0
    %v643 = vadd.f32 0.0, %v642
    %v644 = vpop.f32.mrb[0].mxu0
    %645 = vmatprep.mubr.f32.mxu0 0.0
    %646 = vmatmul.mubr.f32.gmra.mrb[0].mxu0 %v468
    %v647 = vpop.f32.mrb[0].mxu0
    %v648 = vadd.f32 0.0, %v647
    %v649 = vpop.f32.mrb[0].mxu0
    %650 = vmatprep.mubr.f32.mxu0 0.0
    %651 = vmatmul.mubr.f32.gmra.mrb[0].mxu0 %v471
    %v652 = vpop.f32.mrb[0].mxu0
    %v653 = vadd.f32 0.0, %v652
    %v654 = vpop.f32.mrb[0].mxu0
    %655 = vmatprep.mubr.f32.mxu0 0.0
    %656 = vmatmul.mubr.f32.gmra.mrb[0].mxu0 %v474
    %v657 = vpop.f32.mrb[0].mxu0
    %v658 = vadd.f32 0.0, %v657
    %v659 = vpop.f32.mrb[0].mxu0
    %660 = vmatprep.mubr.f32.mxu0 0.0
    %661 = vmatmul.mubr.f32.gmra.mrb[0].mxu0 %v477
    %v662 = vpop.f32.mrb[0].mxu0
    %v663 = vadd.f32 0.0, %v662
    %v664 = vpop.f32.mrb[0].mxu0
    %665 = vmatprep.mubr.f32.mxu0 0.0
    %666 = vmatmul.mubr.f32.gmra.mrb[0].mxu0 %v480
    %v667 = vpop.f32.mrb[0].mxu0
    %v668 = vadd.f32 0.0, %v667
    %v669 = vpop.f32.mrb[0].mxu0
    %670 = vmatprep.mubr.f32.mxu0 0.0
    %671 = vmatmul.mubr.f32.gmra.mrb[0].mxu0 %v483
    %v672 = vpop.f32.mrb[0].mxu0
    %v673 = vadd.f32 0.0, %v672
    %v674 = vpop.f32.mrb[0].mxu0
    %675 = vmatprep.mubr.f32.mxu0 0.0
    %676 = vmatmul.mubr.f32.gmra.mrb[0].mxu0 %v486
    %v677 = vpop.f32.mrb[0].mxu0
    %v678 = vadd.f32 0.0, %v677
    %v679 = vpop.f32.mrb[0].mxu0
    %680 = vdwg.mxu0
    %681 = vst [vmem:[#allocation7] sm:$0xff] %v603
    %682 = vst [vmem:[#allocation7 + $0x8] sm:$0xff] %v608
    %683 = vst [vmem:[#allocation7 + $0x10] sm:$0xff] %v613
    %684 = vst [vmem:[#allocation7 + $0x18] sm:$0xff] %v618
    %685 = vst [vmem:[#allocation7 + $0x20] sm:$0xff] %v623
    %686 = vst [vmem:[#allocation7 + $0x28] sm:$0xff] %v628
    %687 = vst [vmem:[#allocation7 + $0x30] sm:$0xff] %v633
    %688 = vst [vmem:[#allocation7 + $0x38] sm:$0xff] %v638
    %689 = vst [vmem:[#allocation7 + $0x40] sm:$0xff] %v643
    %690 = vst [vmem:[#allocation7 + $0x48] sm:$0xff] %v648
    %691 = vst [vmem:[#allocation7 + $0x50] sm:$0xff] %v653
    %692 = vst [vmem:[#allocation7 + $0x58] sm:$0xff] %v658
    %693 = vst [vmem:[#allocation7 + $0x60] sm:$0xff] %v663
    %694 = vst [vmem:[#allocation7 + $0x68] sm:$0xff] %v668
    %695 = vst [vmem:[#allocation7 + $0x70] sm:$0xff] %v673
    %696 = vst [vmem:[#allocation7 + $0x78] sm:$0xff] %v678
    // Predicated region
    $region22: #{tpu_custom_call.1} parent=1 // pred_check
      _
    $region23: #{tpu_custom_call.1} parent=1 // pred_check_branch
      %698 = sbr.rel (0) target = $region25
    $region24: #{tpu_custom_call.1} parent=1 // pred_region
      %s700 = ssub.s32 2048, 2048
      %701 = vsyncadd [#allocation4], %s700
      %s702 = sshll.u32 [#allocation7], 4
      %s703 = int_to_ptr.vmem [resolvable:$true] %s702
      %708 = dma.vmem_to_hbm [thread:$0]  %s703, 2048, %s3, [#allocation4], 128, 128, 8
    $region25: #{tpu_custom_call.1} parent=1 // pred_fallthru
      _
    // Predicated region
    $region26: #{tpu_custom_call.1} parent=1 // pred_check
      _
    $region27: #{tpu_custom_call.1} parent=1 // pred_check_branch
      %710 = sbr.rel (0) target = $region29
    $region28: #{tpu_custom_call.1} parent=1 // pred_region
      %711 = dma.done [#allocation4], 2048
    $region29: #{tpu_custom_call.1} parent=1 // pred_fallthru
      _
    %712 = vsyncpa [#allocation3], 1
    %713 = vsyncpa [#allocation6], 1
    %714 = vsyncpa [#allocation4], 1

</llo_original>
